<compile_context>
chip_gen: v6e
topology: v6e:2x2x1
jax: 0.10.0
libtpu: 0.0.40
codegen_flags: <defaults>
</compile_context>

<pallas_src>
from functools import partial

import numpy as np
import jax
import jax.numpy as jnp
from jax import lax
from jax.experimental import pallas as pl
from jax.experimental.pallas import tpu as pltpu


# ----------------------------- Pallas kernel -----------------------------

def mlp_critic_kernel(x_ref, w1_ref, b1_ref, w2_ref, b2_ref, w3_ref, b3_ref,
                      o_ref, *, act_dtype):
    # x tile arrives in its natural (TILE_B, D) layout; cast the MXU operand
    # to the weight dtype (bf16 by default) in-kernel -- no host pre-pass.
    xb = x_ref[...].astype(w1_ref.dtype)

    # Layer 1: contract the feature axes of W1 (H, D) and x (TILE_B, D)
    # directly -> (H, TILE_B).  Hidden activations are feature-major: the
    # batch sits on the 128-lane axis for the rest of the kernel.
    z1 = lax.dot_general(
        w1_ref[...], xb,
        dimension_numbers=(((1,), (1,)), ((), ())),
        preferred_element_type=jnp.float32) + b1_ref[...]
    h1 = jnp.tanh(z1.astype(act_dtype))

    # Layer 2: (H, H) @ (H, TILE_B) -> (H, TILE_B), f32 accumulation.
    z2 = jnp.dot(w2_ref[...], h1.astype(w2_ref.dtype),
                 preferred_element_type=jnp.float32) + b2_ref[...]
    h2 = jnp.tanh(z2.astype(act_dtype))

    # Value head on VPU/XLU (broadcast-mul + sublane reduce) -> (1, TILE_B);
    # an N=1 MXU matmul would be almost entirely wasted.
    v = jnp.sum(h2.astype(jnp.float32) * w3_ref[...], axis=0, keepdims=True) \
        + b3_ref[...]
    o_ref[...] = v.astype(o_ref.dtype)


# ------------------------------- wrapper ----------------------------------

def _round_up(x, m):
    return ((x + m - 1) // m) * m


def mlp_critic_forward(x, params, *, tile_b=4096,
                       compute_dtype=jnp.bfloat16,
                       act_dtype=jnp.float32):
    """MLPCritic forward.

    x: (B, obs_dim) float32.  params in PyTorch layout:
      w1 (H, D), b1 (H,), w2 (H, H), b2 (H,), w3 (1, H), b3 (1,).
    Returns (B, 1) float32 values.

    compute_dtype: dtype of the MXU operands (x cast in-kernel, W1/W2).  bf16
      (default) is MXU-native on v5e/v6e/v7x; it truncates activations to
      ~1e-2 relative error -- pass jnp.float32 for a full-precision path.
    act_dtype: dtype tanh is evaluated in.  Keep f32 on v5e (no bf16 EUP);
      bf16 can help on v6e/v7x if the EUP ever becomes the bottleneck.
    tile_b: batch-tile width (rounded to a multiple of 128).  Bigger tiles
      amortize the ~0.35 us per-grid-step overhead; the 4096 default fits all
      generations' default scoped VMEM.
    """
    B, D = x.shape
    H = params["w1"].shape[0]

    # --- batch tiling -------------------------------------------------------
    B_128 = _round_up(B, 128)
    tile = min(_round_up(max(tile_b, 128), 128), B_128)
    if B_128 >= 2 * 128:
        # Keep at least two batch tiles so v7x's two TensorCores both get work
        # (costs one extra ~0.35 us grid step on single-TC chips -- negligible).
        tile = min(tile, _round_up(pl.cdiv(B_128, 2), 128))
    n_tiles = pl.cdiv(B_128, tile)
    B_pad = n_tiles * tile

    # Pad the batch only when needed; no transpose pre-pass.  (For tiny
    # batches a plain-JAX path would avoid the padded work entirely; kept on
    # the Pallas path here so the kernel is always exercised.)
    x_in = x if B_pad == B else jnp.zeros((B_pad, D), x.dtype).at[:B, :].set(x)

    # Params: MXU operands in compute_dtype; biases and the tiny value-head
    # column stay f32 (VPU adds/muls).
    w1 = params["w1"].astype(compute_dtype)                  # (H, D)
    b1 = params["b1"].reshape(H, 1).astype(jnp.float32)      # (H, 1)
    w2 = params["w2"].astype(compute_dtype)                  # (H, H)
    b2 = params["b2"].reshape(H, 1).astype(jnp.float32)      # (H, 1)
    w3 = params["w3"].reshape(H, 1).astype(jnp.float32)      # (H, 1) column
    b3 = params["b3"].reshape(1, 1).astype(jnp.float32)      # (1, 1)

    grid_spec = pltpu.PrefetchScalarGridSpec(
        num_scalar_prefetch=0,
        grid=(n_tiles,),
        in_specs=[
            # x is the only streamed input: one (tile, D) slab per grid step,
            # double-buffered by the BlockSpec pipeline.
            pl.BlockSpec((tile, D), lambda i: (i, 0)),
            # Params: constant block index -> DMA'd once, VMEM-resident.
            pl.BlockSpec((H, D), lambda i: (0, 0)),
            pl.BlockSpec((H, 1), lambda i: (0, 0)),
            pl.BlockSpec((H, H), lambda i: (0, 0)),
            pl.BlockSpec((H, 1), lambda i: (0, 0)),
            pl.BlockSpec((H, 1), lambda i: (0, 0)),
            pl.BlockSpec((1, 1), lambda i: (0, 0)),
        ],
        # Lane-dense output row: last dim = tile (multiple of 128).
        out_specs=pl.BlockSpec((1, tile), lambda i: (0, i)),
    )

    out_t = pl.pallas_call(
        partial(mlp_critic_kernel, act_dtype=act_dtype),
        out_shape=jax.ShapeDtypeStruct((1, B_pad), jnp.float32),
        grid_spec=grid_spec,
        compiler_params=pltpu.CompilerParams(
            # Batch tiles are independent -> shard across v7x's 2 TensorCores.
            dimension_semantics=("parallel",),
        ),
    )(x_in, w1, b1, w2, b2, w3, b3)

    # Back to PyTorch layout (B, 1); drop any batch padding.
    return out_t[0, :B].reshape(B, 1)


# ------------------------- deterministic parameters -------------------------

def orthogonal_init(key, shape, gain=1.0):
    """Matches torch.nn.init.orthogonal_ semantics: QR of a (rows, cols)
    Gaussian (transposed if rows < cols), sign-corrected by diag(R)."""
    rows, cols = shape
    a = jax.random.normal(key, (rows, cols), dtype=jnp.float32)
    if rows < cols:
        a = a.T
    q, r = jnp.linalg.qr(a)
    d = jnp.diagonal(r)
    q = q * jnp.where(d >= 0, 1.0, -1.0)[None, :]   # avoid sign(0) == 0
    if rows < cols:
        q = q.T
    return gain * q


def make_params(obs_dim, hidden=64, key=jax.random.PRNGKey(0)):
    k1, k2, k3 = jax.random.split(key, 3)
    g = float(np.sqrt(2.0))
    # PyTorch layout: weight (out_features, in_features), bias (out_features,)
    return {
        "w1": orthogonal_init(k1, (hidden, obs_dim), g),
        "b1": jnp.zeros((hidden,), jnp.float32),
        "w2": orthogonal_init(k2, (hidden, hidden), g),
        "b2": jnp.zeros((hidden,), jnp.float32),
        "w3": orthogonal_init(k3, (1, hidden), 1.0),
        "b3": jnp.zeros((1,), jnp.float32),
    }


# ------------------------------- reference --------------------------------

def mlp_critic_ref(x, p):
    h1 = jnp.tanh(x @ p["w1"].T + p["b1"])
    h2 = jnp.tanh(h1 @ p["w2"].T + p["b2"])
    return h2 @ p["w3"].T + p["b3"]


# --------------------------------- main ------------------------------------

if __name__ == "__main__":
    key = jax.random.PRNGKey(0)
    kx, kp, kx2 = jax.random.split(key, 3)

    obs_dim, hidden = 16, 64
    params = make_params(obs_dim, hidden, kp)

    # Small batch, default bf16 MXU-operand path (single 128-wide tile).
    batch = 8
    x = jax.random.normal(kx, (batch, obs_dim), dtype=jnp.float32)
    ref = mlp_critic_ref(x, params)

    out = jax.block_until_ready(mlp_critic_forward(x, params))
    assert out.shape == (batch, 1)
    np.testing.assert_allclose(np.asarray(out), np.asarray(ref),
                               rtol=5e-2, atol=5e-2)

    # Full-precision path (f32 MXU operands) -> tight tolerance.
    out_f32 = jax.block_until_ready(
        mlp_critic_forward(x, params, compute_dtype=jnp.float32))
    np.testing.assert_allclose(np.asarray(out_f32), np.asarray(ref),
                               rtol=1e-5, atol=1e-5)

    # Ragged, multi-tile batch: exercises the grid (>= 2 tiles for v7x's two
    # TensorCores), the only-when-needed batch padding, and the pad slice-off.
    batch2 = 300
    x2 = jax.random.normal(kx2, (batch2, obs_dim), dtype=jnp.float32)
    ref2 = mlp_critic_ref(x2, params)
    out2 = jax.block_until_ready(mlp_critic_forward(x2, params))
    assert out2.shape == (batch2, 1)
    np.testing.assert_allclose(np.asarray(out2), np.asarray(ref2),
                               rtol=5e-2, atol=5e-2)

    print("KERNEL_OK")
</pallas_src>

<mosaic_0001>
module attributes {stable_mosaic.version = 11 : i64} {
  func.func @mlp_critic_kernel(%arg0: i32, %arg1: memref<128x16xf32, #tpu.memory_space<vmem>>, %arg2: memref<64x16xbf16, #tpu.memory_space<vmem>>, %arg3: memref<64x1xf32, #tpu.memory_space<vmem>>, %arg4: memref<64x64xbf16, #tpu.memory_space<vmem>>, %arg5: memref<64x1xf32, #tpu.memory_space<vmem>>, %arg6: memref<64x1xf32, #tpu.memory_space<vmem>>, %arg7: memref<1x1xf32, #tpu.memory_space<vmem>>, %arg8: memref<1x128xf32, #tpu.memory_space<vmem>>) attributes {dimension_semantics = [#tpu.dimension_semantics<parallel>], iteration_bounds = array<i64: 1>, scalar_prefetch = 0 : i64, scratch_operands = 0 : i64, tpu.core_type = #tpu.core_type<tc>, window_params = [{transform_indices = @transform_0, window_bounds = array<i64: 128, 16>}, {pipeline_mode = #tpu.pipeline_mode<synchronous>, transform_indices = @transform_1, window_bounds = array<i64: 64, 16>}, {pipeline_mode = #tpu.pipeline_mode<synchronous>, transform_indices = @transform_2, window_bounds = array<i64: 64, 1>}, {pipeline_mode = #tpu.pipeline_mode<synchronous>, transform_indices = @transform_3, window_bounds = array<i64: 64, 64>}, {pipeline_mode = #tpu.pipeline_mode<synchronous>, transform_indices = @transform_4, window_bounds = array<i64: 64, 1>}, {pipeline_mode = #tpu.pipeline_mode<synchronous>, transform_indices = @transform_5, window_bounds = array<i64: 64, 1>}, {pipeline_mode = #tpu.pipeline_mode<synchronous>, transform_indices = @transform_6, window_bounds = array<i64: 1, 1>}, {transform_indices = @transform_7, window_bounds = array<i64: 1, 128>}]} {
    %c0 = arith.constant 0 : index
    %c0_0 = arith.constant 0 : index
    %0 = vector.load %arg1[%c0, %c0_0] : memref<128x16xf32, #tpu.memory_space<vmem>>, vector<128x16xf32>
    %1 = arith.truncf %0 : vector<128x16xf32> to vector<128x16xbf16>
    %c0_1 = arith.constant 0 : index
    %c0_2 = arith.constant 0 : index
    %2 = vector.load %arg2[%c0_1, %c0_2] : memref<64x16xbf16, #tpu.memory_space<vmem>>, vector<64x16xbf16>
    %cst = arith.constant dense<0.000000e+00> : vector<64x128xf32>
    %3 = tpu.matmul %2, %1, %cst {dimension_numbers = #tpu.dot_dimension_numbers<[1], [1], [0], [0], [0, 0, 1, 0], [], []>} : vector<64x16xbf16>, vector<128x16xbf16>, vector<64x128xf32> -> vector<64x128xf32>
    %c0_3 = arith.constant 0 : index
    %c0_4 = arith.constant 0 : index
    %4 = vector.load %arg3[%c0_3, %c0_4] : memref<64x1xf32, #tpu.memory_space<vmem>>, vector<64x1xf32>
    %5 = vector.broadcast %4 : vector<64x1xf32> to vector<64x128xf32>
    %6 = arith.addf %3, %5 : vector<64x128xf32>
    %7 = math.tanh %6 : vector<64x128xf32>
    %c0_5 = arith.constant 0 : index
    %c0_6 = arith.constant 0 : index
    %8 = vector.load %arg4[%c0_5, %c0_6] : memref<64x64xbf16, #tpu.memory_space<vmem>>, vector<64x64xbf16>
    %9 = arith.truncf %7 : vector<64x128xf32> to vector<64x128xbf16>
    %cst_7 = arith.constant dense<0.000000e+00> : vector<64x128xf32>
    %10 = tpu.matmul %8, %9, %cst_7 {dimension_numbers = #tpu.dot_dimension_numbers<[1], [0], [0], [1], [0, 0, 1, 1], [], []>} : vector<64x64xbf16>, vector<64x128xbf16>, vector<64x128xf32> -> vector<64x128xf32>
    %c0_8 = arith.constant 0 : index
    %c0_9 = arith.constant 0 : index
    %11 = vector.load %arg5[%c0_8, %c0_9] : memref<64x1xf32, #tpu.memory_space<vmem>>, vector<64x1xf32>
    %12 = vector.broadcast %11 : vector<64x1xf32> to vector<64x128xf32>
    %13 = arith.addf %10, %12 : vector<64x128xf32>
    %14 = math.tanh %13 : vector<64x128xf32>
    %c0_10 = arith.constant 0 : index
    %c0_11 = arith.constant 0 : index
    %15 = vector.load %arg6[%c0_10, %c0_11] : memref<64x1xf32, #tpu.memory_space<vmem>>, vector<64x1xf32>
    %16 = vector.broadcast %15 : vector<64x1xf32> to vector<64x128xf32>
    %17 = arith.mulf %14, %16 : vector<64x128xf32>
    %cst_12 = arith.constant dense<0.000000e+00> : vector<128xf32>
    %18 = vector.multi_reduction <add>, %17, %cst_12 [0] : vector<64x128xf32> to vector<128xf32>
    %19 = vector.shape_cast %18 : vector<128xf32> to vector<1x128xf32>
    %c0_13 = arith.constant 0 : index
    %c0_14 = arith.constant 0 : index
    %20 = vector.load %arg7[%c0_13, %c0_14] : memref<1x1xf32, #tpu.memory_space<vmem>>, vector<1x1xf32>
    %21 = vector.broadcast %20 : vector<1x1xf32> to vector<1x128xf32>
    %22 = arith.addf %19, %21 : vector<1x128xf32>
    %c0_15 = arith.constant 0 : index
    %c0_16 = arith.constant 0 : index
    %23 = vector.load %arg8[%c0_15, %c0_16] : memref<1x128xf32, #tpu.memory_space<vmem>>, vector<1x128xf32>
    tpu.vector_store %arg8[%c0_15, %c0_16], %22 {strides = array<i32>} : memref<1x128xf32, #tpu.memory_space<vmem>>, vector<1x128xf32>,
    return
  }
  func.func @transform_0(%arg0: i32) -> (i32, i32) {
    %c0_i32 = arith.constant 0 : i32
    %c0_i32_0 = arith.constant 0 : i32
    return %arg0, %c0_i32 : i32, i32
  }
  func.func @transform_1(%arg0: i32) -> (i32, i32) {
    %c0_i32 = arith.constant 0 : i32
    %c0_i32_0 = arith.constant 0 : i32
    %c0_i32_1 = arith.constant 0 : i32
    return %c0_i32, %c0_i32_0 : i32, i32
  }
  func.func @transform_2(%arg0: i32) -> (i32, i32) {
    %c0_i32 = arith.constant 0 : i32
    %c0_i32_0 = arith.constant 0 : i32
    %c0_i32_1 = arith.constant 0 : i32
    return %c0_i32, %c0_i32_0 : i32, i32
  }
  func.func @transform_3(%arg0: i32) -> (i32, i32) {
    %c0_i32 = arith.constant 0 : i32
    %c0_i32_0 = arith.constant 0 : i32
    %c0_i32_1 = arith.constant 0 : i32
    return %c0_i32, %c0_i32_0 : i32, i32
  }
  func.func @transform_4(%arg0: i32) -> (i32, i32) {
    %c0_i32 = arith.constant 0 : i32
    %c0_i32_0 = arith.constant 0 : i32
    %c0_i32_1 = arith.constant 0 : i32
    return %c0_i32, %c0_i32_0 : i32, i32
  }
  func.func @transform_5(%arg0: i32) -> (i32, i32) {
    %c0_i32 = arith.constant 0 : i32
    %c0_i32_0 = arith.constant 0 : i32
    %c0_i32_1 = arith.constant 0 : i32
    return %c0_i32, %c0_i32_0 : i32, i32
  }
  func.func @transform_6(%arg0: i32) -> (i32, i32) {
    %c0_i32 = arith.constant 0 : i32
    %c0_i32_0 = arith.constant 0 : i32
    %c0_i32_1 = arith.constant 0 : i32
    return %c0_i32, %c0_i32_0 : i32, i32
  }
  func.func @transform_7(%arg0: i32) -> (i32, i32) {
    %c0_i32 = arith.constant 0 : i32
    %c0_i32_0 = arith.constant 0 : i32
    return %c0_i32, %arg0 : i32, i32
  }
}

</mosaic_0001>

<llo_original>
// kernel: tpu_custom_call.1
$region0: #{tpu_custom_call.1}
  #allocation0 [shape = 'u32[]', space=smem, size = 0x4, offset = 0x4, fixed_abs, tag = 'smem constant byte address 0x4 - core index']
  #allocation1 [shape = 'u32[144,128]{1,0:T(1,128)}', space=vmem, size = 0x12000, scoped, tag = 'internal scratch']
  #allocation2 [shape = 'f32[1,1]{1,0:T(1,128)S(1)}', space=vmem, size = 0x200, scoped, tag = 'scoped memory for tpu_custom_call.1']
  %s0 = inlined_call_operand.vmem [shape: f32[128,16], index: 0, kind: input, shape index: {}]
  %s1 = inlined_call_operand.vmem [shape: bf16[64,16], index: 1, kind: input, shape index: {}]
  %s2 = inlined_call_operand.vmem [shape: f32[64,1], index: 2, kind: input, shape index: {}]
  %s3 = inlined_call_operand.vmem [shape: bf16[64,64], index: 3, kind: input, shape index: {}]
  %s4 = inlined_call_operand.vmem [shape: f32[64,1], index: 4, kind: input, shape index: {}]
  %s5 = inlined_call_operand.vmem [shape: f32[64,1], index: 5, kind: input, shape index: {}]
  %s6 = inlined_call_operand.<no memory space> [shape: f32[1,1], index: 6, kind: input, shape index: {}]
  %s7 = inlined_call_operand.hbm [shape: f32[1,128], index: 7, kind: output, shape index: {}]
  %s8 = sld [smem:[#allocation0]]
  $region38: #{tpu_custom_call.1} parent=0
    _
  %s10 = ssub.s32 1, %s8
  %s11 = scalar_select 0, %s10, %s8
  %v12 = vstv %s6
  %13 = vst [vmem:[#allocation2] sm:$0x1] %v12
  $region1: #{tpu_custom_call.1} parent=0
    #allocation3 [shape = 'u8[512]{0}', space=vmem, size = 0x400, scoped, tag = 'output window, operand 0, single buffered']
    #allocation4 [shape = 's32[1]{0}', space=sflag, size = 0x4, scoped, tag = 'scoped memory for tpu_custom_call.1']
    %14 = vsyncpa [#allocation4], 0
    // Predicated region
    $region2: #{tpu_custom_call.1} parent=1 // pred_check
      _
    $region3: #{tpu_custom_call.1} parent=1 // pred_check_branch
      %16 = sbr.rel (0) target = $region5
    $region4: #{tpu_custom_call.1} parent=1 // pred_region
      _
    $region5: #{tpu_custom_call.1} parent=1 // pred_fallthru
      _
    // Predicated region
    $region6: #{tpu_custom_call.1} parent=1 // pred_check
      _
    $region7: #{tpu_custom_call.1} parent=1 // pred_check_branch
      %18 = sbr.rel (0) target = $region9
    $region8: #{tpu_custom_call.1} parent=1 // pred_region
      _
    $region9: #{tpu_custom_call.1} parent=1 // pred_fallthru
      _
    // Predicated region
    $region10: #{tpu_custom_call.1} parent=1 // pred_check
      _
    $region11: #{tpu_custom_call.1} parent=1 // pred_check_branch
      %20 = sbr.rel (0) target = $region13
    $region12: #{tpu_custom_call.1} parent=1 // pred_region
      _
    $region13: #{tpu_custom_call.1} parent=1 // pred_fallthru
      _
    // Predicated region
    $region14: #{tpu_custom_call.1} parent=1 // pred_check
      _
    $region15: #{tpu_custom_call.1} parent=1 // pred_check_branch
      %22 = sbr.rel (0) target = $region17
    $region16: #{tpu_custom_call.1} parent=1 // pred_region
      _
    $region17: #{tpu_custom_call.1} parent=1 // pred_fallthru
      _
    // Predicated region
    $region18: #{tpu_custom_call.1} parent=1 // pred_check
      _
    $region19: #{tpu_custom_call.1} parent=1 // pred_check_branch
      %24 = sbr.rel (0) target = $region21
    $region20: #{tpu_custom_call.1} parent=1 // pred_region
      _
    $region21: #{tpu_custom_call.1} parent=1 // pred_fallthru
      _
    // Predicated region
    $region22: #{tpu_custom_call.1} parent=1 // pred_check
      _
    $region23: #{tpu_custom_call.1} parent=1 // pred_check_branch
      %26 = sbr.rel (0) target = $region25
    $region24: #{tpu_custom_call.1} parent=1 // pred_region
      _
    $region25: #{tpu_custom_call.1} parent=1 // pred_fallthru
      _
    // Predicated region
    $region26: #{tpu_custom_call.1} parent=1 // pred_check
      _
    $region27: #{tpu_custom_call.1} parent=1 // pred_check_branch
      %28 = sbr.rel (0) target = $region29
    $region28: #{tpu_custom_call.1} parent=1 // pred_region
      _
    $region29: #{tpu_custom_call.1} parent=1 // pred_fallthru
      _
    %v30 = vld [vmem:[%s0] sm:$0xff]
    %v31 = vld [vmem:[%s0 + $0x8] sm:$0xff]
    %v32 = vld [vmem:[%s0 + $0x10] sm:$0xff]
    %v33 = vld [vmem:[%s0 + $0x18] sm:$0xff]
    %v34 = vld [vmem:[%s0 + $0x20] sm:$0xff]
    %v35 = vld [vmem:[%s0 + $0x28] sm:$0xff]
    %v36 = vld [vmem:[%s0 + $0x30] sm:$0xff]
    %v37 = vld [vmem:[%s0 + $0x38] sm:$0xff]
    %v38 = vld [vmem:[%s0 + $0x40] sm:$0xff]
    %v39 = vld [vmem:[%s0 + $0x48] sm:$0xff]
    %v40 = vld [vmem:[%s0 + $0x50] sm:$0xff]
    %v41 = vld [vmem:[%s0 + $0x58] sm:$0xff]
    %v42 = vld [vmem:[%s0 + $0x60] sm:$0xff]
    %v43 = vld [vmem:[%s0 + $0x68] sm:$0xff]
    %v44 = vld [vmem:[%s0 + $0x70] sm:$0xff]
    %v45 = vld [vmem:[%s0 + $0x78] sm:$0xff]
    %v46 = vpack.c.bf16 %v31, %v30
    %v47 = vpack.c.bf16 %v33, %v32
    %v48 = vpack.c.bf16 %v35, %v34
    %v49 = vpack.c.bf16 %v37, %v36
    %v50 = vpack.c.bf16 %v39, %v38
    %v51 = vpack.c.bf16 %v41, %v40
    %v52 = vpack.c.bf16 %v43, %v42
    %v53 = vpack.c.bf16 %v45, %v44
    %v54 = vld [vmem:[%s1] sm:$0xf]
    %v55 = vld [vmem:[%s1 + $0x4] sm:$0xf]
    %v56 = vld [vmem:[%s1 + $0x8] sm:$0xf]
    %v57 = vld [vmem:[%s1 + $0xc] sm:$0xf]
    %v58 = vld [vmem:[%s1 + $0x10] sm:$0xf]
    %v59 = vld [vmem:[%s1 + $0x14] sm:$0xf]
    %v60 = vld [vmem:[%s1 + $0x18] sm:$0xf]
    %v61 = vld [vmem:[%s1 + $0x1c] sm:$0xf]
    %v62 = vld [vmem:[%s2] sm:$0xff]
    %v63 = vld [vmem:[%s2 + $0x8] sm:$0xff]
    %v64 = vld [vmem:[%s2 + $0x10] sm:$0xff]
    %v65 = vld [vmem:[%s2 + $0x18] sm:$0xff]
    %v66 = vld [vmem:[%s2 + $0x20] sm:$0xff]
    %v67 = vld [vmem:[%s2 + $0x28] sm:$0xff]
    %v68 = vld [vmem:[%s2 + $0x30] sm:$0xff]
    %v69 = vld [vmem:[%s2 + $0x38] sm:$0xff]
    %71 = vset.pattern.permute.xlu0 0
    %72 = vperm.xlu0 %71, %v62
    %v73 = vpop.permute.xlu0 %72
    %76 = vset.pattern.permute.xlu0 0
    %77 = vperm.xlu0 %76, %v63
    %v78 = vpop.permute.xlu0 %77
    %81 = vset.pattern.permute.xlu0 0
    %82 = vperm.xlu0 %81, %v64
    %v83 = vpop.permute.xlu0 %82
    %86 = vset.pattern.permute.xlu0 0
    %87 = vperm.xlu0 %86, %v65
    %v88 = vpop.permute.xlu0 %87
    %91 = vset.pattern.permute.xlu0 0
    %92 = vperm.xlu0 %91, %v66
    %v93 = vpop.permute.xlu0 %92
    %96 = vset.pattern.permute.xlu0 0
    %97 = vperm.xlu0 %96, %v67
    %v98 = vpop.permute.xlu0 %97
    %101 = vset.pattern.permute.xlu0 0
    %102 = vperm.xlu0 %101, %v68
    %v103 = vpop.permute.xlu0 %102
    %106 = vset.pattern.permute.xlu0 0
    %107 = vperm.xlu0 %106, %v69
    %v108 = vpop.permute.xlu0 %107
    %v118 = vunpack.c.l.b16 %v54
    %v119 = vunpack.c.l.b16 %v55
    %v120 = vunpack.c.l.b16 %v56
    %v121 = vunpack.c.l.b16 %v57
    %v122 = vunpack.c.l.b16 %v58
    %v123 = vunpack.c.l.b16 %v59
    %v124 = vunpack.c.l.b16 %v60
    %v125 = vunpack.c.l.b16 %v61
    %v126 = vpack.c.b16 %v119, %v118
    %v127 = vpack.c.b16 %v121, %v120
    %v128 = vpack.c.b16 %v123, %v122
    %v129 = vpack.c.b16 %v125, %v124
    %vm130 = vcmask 130048
    %v132 = vsel %vm130, %v126, 0
    %v135 = vsel %vm130, %v127, 0
    %v138 = vsel %vm130, %v128, 0
    %v141 = vsel %vm130, %v129, 0
    %v144 = vsel %vm130, %v46, 0
    %v147 = vsel %vm130, %v47, 0
    %v150 = vsel %vm130, %v48, 0
    %v153 = vsel %vm130, %v49, 0
    %v156 = vsel %vm130, %v50, 0
    %v159 = vsel %vm130, %v51, 0
    %v162 = vsel %vm130, %v52, 0
    %v165 = vsel %vm130, %v53, 0
    %167 = vmatprep.subr.bf16.mxu0 0
    %168 = vmatpush1.bf16.xpose.msra.mxu0 %v165
    %169 = vmatprep.subr.bf16.mxu0 0
    %170 = vmatpush1.bf16.xpose.msra.mxu0 %v162
    %171 = vmatprep.subr.bf16.mxu0 0
    %172 = vmatpush1.bf16.xpose.msra.mxu0 %v159
    %173 = vmatprep.subr.bf16.mxu0 0
    %174 = vmatpush1.bf16.xpose.msra.mxu0 %v156
    %175 = vmatprep.subr.bf16.mxu0 0
    %176 = vmatpush1.bf16.xpose.msra.mxu0 %v153
    %177 = vmatprep.subr.bf16.mxu0 0
    %178 = vmatpush1.bf16.xpose.msra.mxu0 %v150
    %179 = vmatprep.subr.bf16.mxu0 0
    %180 = vmatpush1.bf16.xpose.msra.mxu0 %v147
    %181 = vmatprep.subr.bf16.mxu0 0
    %182 = vmatpush1.bf16.xpose.msra.mxu0 %v144
    %183 = vmatprep.subr.bf16.mxu0 0
    %184 = vmatpush2.bf16.xpose.msra.mxu0 0
    %185 = vmatprep.subr.bf16.mxu0 0
    %186 = vmatpush2.bf16.xpose.msra.mxu0 0
    %187 = vmatprep.subr.bf16.mxu0 0
    %188 = vmatpush2.bf16.xpose.msra.mxu0 0
    %189 = vmatprep.subr.bf16.mxu0 0
    %190 = vmatpush2.bf16.xpose.msra.mxu0 0
    %191 = vmatprep.subr.bf16.mxu0 0
    %192 = vmatpush2.bf16.xpose.msra.mxu0 0
    %193 = vmatprep.subr.bf16.mxu0 0
    %194 = vmatpush2.bf16.xpose.msra.mxu0 0
    %195 = vmatprep.subr.bf16.mxu0 0
    %196 = vmatpush2.bf16.xpose.msra.mxu0 0
    %197 = vmatprep.subr.bf16.mxu0 0
    %198 = vmatpush2.bf16.xpose.msra.mxu0 0
    %199 = vmatprep.mubr.bf16.mxu0 0
    %200 = vmatmul.mubr.bf16.gmra.mxu0 %v132
    %v201 = vpop.f32.mrf.mxu0
    %v202 = vadd.f32 %v73, %v201
    %v203 = vpop.f32.mrf.mxu0
    %v204 = vpop.f32.mrf.mxu0
    %v205 = vadd.f32 %v78, %v204
    %v206 = vpop.f32.mrf.mxu0
    %207 = vmatprep.mubr.bf16.mxu0 0
    %208 = vmatmul.mubr.bf16.gmra.mxu0 %v135
    %v209 = vpop.f32.mrf.mxu0
    %v210 = vadd.f32 %v83, %v209
    %v211 = vpop.f32.mrf.mxu0
    %v212 = vpop.f32.mrf.mxu0
    %v213 = vadd.f32 %v88, %v212
    %v214 = vpop.f32.mrf.mxu0
    %215 = vmatprep.mubr.bf16.mxu0 0
    %216 = vmatmul.mubr.bf16.gmra.mxu0 %v138
    %v217 = vpop.f32.mrf.mxu0
    %v218 = vadd.f32 %v93, %v217
    %v219 = vpop.f32.mrf.mxu0
    %v220 = vpop.f32.mrf.mxu0
    %v221 = vadd.f32 %v98, %v220
    %v222 = vpop.f32.mrf.mxu0
    %223 = vmatprep.mubr.bf16.mxu0 0
    %224 = vmatmul.mubr.bf16.gmra.mxu0 %v141
    %v225 = vpop.f32.mrf.mxu0
    %v226 = vadd.f32 %v103, %v225
    %v227 = vpop.f32.mrf.mxu0
    %v228 = vpop.f32.mrf.mxu0
    %v229 = vadd.f32 %v108, %v228
    %v230 = vpop.f32.mrf.mxu0
    %231 = vdwg.mxu0
    %v232 = vtanh.pop %v202
    %v233 = vtanh.pop %v205
    %v234 = vtanh.pop %v210
    %v235 = vtanh.pop %v213
    %v236 = vtanh.pop %v218
    %v237 = vtanh.pop %v221
    %v238 = vtanh.pop %v226
    %v239 = vtanh.pop %v229
    %v240 = vld [vmem:[%s3] sm:$0xf]
    %v241 = vld [vmem:[%s3 + $0x4] sm:$0xf]
    %v242 = vld [vmem:[%s3 + $0x8] sm:$0xf]
    %v243 = vld [vmem:[%s3 + $0xc] sm:$0xf]
    %v244 = vld [vmem:[%s3 + $0x10] sm:$0xf]
    %v245 = vld [vmem:[%s3 + $0x14] sm:$0xf]
    %v246 = vld [vmem:[%s3 + $0x18] sm:$0xf]
    %v247 = vld [vmem:[%s3 + $0x1c] sm:$0xf]
    %v248 = vpack.c.bf16 %v233, %v232
    %v249 = vpack.c.bf16 %v235, %v234
    %v250 = vpack.c.bf16 %v237, %v236
    %v251 = vpack.c.bf16 %v239, %v238
    %v252 = vld [vmem:[%s4] sm:$0xff]
    %v253 = vld [vmem:[%s4 + $0x8] sm:$0xff]
    %v254 = vld [vmem:[%s4 + $0x10] sm:$0xff]
    %v255 = vld [vmem:[%s4 + $0x18] sm:$0xff]
    %v256 = vld [vmem:[%s4 + $0x20] sm:$0xff]
    %v257 = vld [vmem:[%s4 + $0x28] sm:$0xff]
    %v258 = vld [vmem:[%s4 + $0x30] sm:$0xff]
    %v259 = vld [vmem:[%s4 + $0x38] sm:$0xff]
    %261 = vset.pattern.permute.xlu0 0
    %262 = vperm.xlu0 %261, %v252
    %v263 = vpop.permute.xlu0 %262
    %266 = vset.pattern.permute.xlu0 0
    %267 = vperm.xlu0 %266, %v253
    %v268 = vpop.permute.xlu0 %267
    %271 = vset.pattern.permute.xlu0 0
    %272 = vperm.xlu0 %271, %v254
    %v273 = vpop.permute.xlu0 %272
    %276 = vset.pattern.permute.xlu0 0
    %277 = vperm.xlu0 %276, %v255
    %v278 = vpop.permute.xlu0 %277
    %281 = vset.pattern.permute.xlu0 0
    %282 = vperm.xlu0 %281, %v256
    %v283 = vpop.permute.xlu0 %282
    %286 = vset.pattern.permute.xlu0 0
    %287 = vperm.xlu0 %286, %v257
    %v288 = vpop.permute.xlu0 %287
    %291 = vset.pattern.permute.xlu0 0
    %292 = vperm.xlu0 %291, %v258
    %v293 = vpop.permute.xlu0 %292
    %296 = vset.pattern.permute.xlu0 0
    %297 = vperm.xlu0 %296, %v259
    %v298 = vpop.permute.xlu0 %297
    %v308 = vunpack.c.l.b16 %v240
    %v309 = vunpack.c.l.b16 %v241
    %v310 = vunpack.c.l.b16 %v242
    %v311 = vunpack.c.l.b16 %v243
    %v312 = vunpack.c.l.b16 %v244
    %v313 = vunpack.c.l.b16 %v245
    %v314 = vunpack.c.l.b16 %v246
    %v315 = vunpack.c.l.b16 %v247
    %v316 = vpack.c.b16 %v309, %v308
    %v317 = vpack.c.b16 %v311, %v310
    %v318 = vpack.c.b16 %v313, %v312
    %v319 = vpack.c.b16 %v315, %v314
    %vm320 = vcmask 523264
    %v322 = vsel %vm320, %v316, 0
    %v325 = vsel %vm320, %v317, 0
    %v328 = vsel %vm320, %v318, 0
    %v331 = vsel %vm320, %v319, 0
    %333 = vmatprep.subr.bf16.mxu0 0
    %334 = vmatpush1.bf16.msra.mxu0 0
    %335 = vmatprep.subr.bf16.mxu0 0
    %336 = vmatpush1.bf16.msra.mxu0 0
    %337 = vmatprep.subr.bf16.mxu0 0
    %338 = vmatpush1.bf16.msra.mxu0 0
    %339 = vmatprep.subr.bf16.mxu0 0
    %340 = vmatpush1.bf16.msra.mxu0 0
    %341 = vmatprep.subr.bf16.mxu0 0
    %342 = vmatpush1.bf16.msra.mxu0 %v251
    %343 = vmatprep.subr.bf16.mxu0 0
    %344 = vmatpush1.bf16.msra.mxu0 %v250
    %345 = vmatprep.subr.bf16.mxu0 0
    %346 = vmatpush1.bf16.msra.mxu0 %v249
    %347 = vmatprep.subr.bf16.mxu0 0
    %348 = vmatpush1.bf16.msra.mxu0 %v248
    %349 = vmatprep.subr.bf16.mxu0 0
    %350 = vmatpush2.bf16.msra.mxu0 0
    %351 = vmatprep.subr.bf16.mxu0 0
    %352 = vmatpush2.bf16.msra.mxu0 0
    %353 = vmatprep.subr.bf16.mxu0 0
    %354 = vmatpush2.bf16.msra.mxu0 0
    %355 = vmatprep.subr.bf16.mxu0 0
    %356 = vmatpush2.bf16.msra.mxu0 0
    %357 = vmatprep.subr.bf16.mxu0 0
    %358 = vmatpush2.bf16.msra.mxu0 0
    %359 = vmatprep.subr.bf16.mxu0 0
    %360 = vmatpush2.bf16.msra.mxu0 0
    %361 = vmatprep.subr.bf16.mxu0 0
    %362 = vmatpush2.bf16.msra.mxu0 0
    %363 = vmatprep.subr.bf16.mxu0 0
    %364 = vmatpush2.bf16.msra.mxu0 0
    %365 = vmatprep.mubr.bf16.mxu0 0
    %366 = vmatmul.mubr.bf16.gmra.mxu0 %v322
    %v367 = vpop.f32.mrf.mxu0
    %v368 = vadd.f32 %v263, %v367
    %v369 = vpop.f32.mrf.mxu0
    %v370 = vpop.f32.mrf.mxu0
    %v371 = vadd.f32 %v268, %v370
    %v372 = vpop.f32.mrf.mxu0
    %373 = vmatprep.mubr.bf16.mxu0 0
    %374 = vmatmul.mubr.bf16.gmra.mxu0 %v325
    %v375 = vpop.f32.mrf.mxu0
    %v376 = vadd.f32 %v273, %v375
    %v377 = vpop.f32.mrf.mxu0
    %v378 = vpop.f32.mrf.mxu0
    %v379 = vadd.f32 %v278, %v378
    %v380 = vpop.f32.mrf.mxu0
    %381 = vmatprep.mubr.bf16.mxu0 0
    %382 = vmatmul.mubr.bf16.gmra.mxu0 %v328
    %v383 = vpop.f32.mrf.mxu0
    %v384 = vadd.f32 %v283, %v383
    %v385 = vpop.f32.mrf.mxu0
    %v386 = vpop.f32.mrf.mxu0
    %v387 = vadd.f32 %v288, %v386
    %v388 = vpop.f32.mrf.mxu0
    %389 = vmatprep.mubr.bf16.mxu0 0
    %390 = vmatmul.mubr.bf16.gmra.mxu0 %v331
    %v391 = vpop.f32.mrf.mxu0
    %v392 = vadd.f32 %v293, %v391
    %v393 = vpop.f32.mrf.mxu0
    %v394 = vpop.f32.mrf.mxu0
    %v395 = vadd.f32 %v298, %v394
    %v396 = vpop.f32.mrf.mxu0
    %397 = vdwg.mxu0
    %v398 = vtanh.pop %v368
    %v399 = vtanh.pop %v371
    %v400 = vtanh.pop %v376
    %v401 = vtanh.pop %v379
    %v402 = vtanh.pop %v384
    %v403 = vtanh.pop %v387
    %v404 = vtanh.pop %v392
    %v405 = vtanh.pop %v395
    %v406 = vld [vmem:[%s5] sm:$0xff]
    %v407 = vld [vmem:[%s5 + $0x8] sm:$0xff]
    %v408 = vld [vmem:[%s5 + $0x10] sm:$0xff]
    %v409 = vld [vmem:[%s5 + $0x18] sm:$0xff]
    %v410 = vld [vmem:[%s5 + $0x20] sm:$0xff]
    %v411 = vld [vmem:[%s5 + $0x28] sm:$0xff]
    %v412 = vld [vmem:[%s5 + $0x30] sm:$0xff]
    %v413 = vld [vmem:[%s5 + $0x38] sm:$0xff]
    %415 = vset.pattern.permute.xlu0 0
    %416 = vperm.xlu0 %415, %v406
    %v417 = vpop.permute.xlu0 %416
    %420 = vset.pattern.permute.xlu0 0
    %421 = vperm.xlu0 %420, %v407
    %v422 = vpop.permute.xlu0 %421
    %425 = vset.pattern.permute.xlu0 0
    %426 = vperm.xlu0 %425, %v408
    %v427 = vpop.permute.xlu0 %426
    %430 = vset.pattern.permute.xlu0 0
    %431 = vperm.xlu0 %430, %v409
    %v432 = vpop.permute.xlu0 %431
    %435 = vset.pattern.permute.xlu0 0
    %436 = vperm.xlu0 %435, %v410
    %v437 = vpop.permute.xlu0 %436
    %440 = vset.pattern.permute.xlu0 0
    %441 = vperm.xlu0 %440, %v411
    %v442 = vpop.permute.xlu0 %441
    %445 = vset.pattern.permute.xlu0 0
    %446 = vperm.xlu0 %445, %v412
    %v447 = vpop.permute.xlu0 %446
    %450 = vset.pattern.permute.xlu0 0
    %451 = vperm.xlu0 %450, %v413
    %v452 = vpop.permute.xlu0 %451
    %v454 = vmul.f32 %v398, %v417
    %v455 = vmul.f32 %v399, %v422
    %v456 = vmul.f32 %v400, %v427
    %v457 = vmul.f32 %v401, %v432
    %v458 = vmul.f32 %v402, %v437
    %v459 = vmul.f32 %v403, %v442
    %v460 = vmul.f32 %v404, %v447
    %v461 = vmul.f32 %v405, %v452
    %v462 = vadd.f32 %v454, %v455
    %v463 = vadd.f32 %v462, %v456
    %v464 = vadd.f32 %v463, %v457
    %v465 = vadd.f32 %v464, %v458
    %v466 = vadd.f32 %v465, %v459
    %v467 = vadd.f32 %v466, %v460
    %v468 = vadd.f32 %v467, %v461
    %v469 = vrot.slane %v468, 4
    %v470 = vadd.f32 %v468, %v469
    %v471 = vrot.slane %v470, 2
    %v472 = vadd.f32 %v470, %v471
    %v473 = vrot.slane %v472, 1
    %v474 = vadd.f32 %v472, %v473
    %v475 = vld [vmem:[#allocation2] sm:$0x1]
    %477 = vset.pattern.permute.xlu0 0
    %478 = vperm.xlu0 %477, %v475
    %v479 = vpop.permute.xlu0 %478
    %v481 = vlaneseq
    %v482 = vshrl.u32 %v481, 7
    %v483 = vsub.s32 0, %v482
    %v484 = vrot.slane %v479, %v483
    %v485 = vadd.f32 %v474, %v484
    %486 = vst [vmem:[#allocation3] sm:$0x1] %v485
    // Predicated region
    $region30: #{tpu_custom_call.1} parent=1 // pred_check
      _
    $region31: #{tpu_custom_call.1} parent=1 // pred_check_branch
      %488 = sbr.rel (0) target = $region33
    $region32: #{tpu_custom_call.1} parent=1 // pred_region
      %s490 = ssub.s32 16, 16
      %491 = vsyncadd [#allocation4], %s490
      %s493 = sshll.u32 [#allocation3], 4
      %s494 = int_to_ptr.vmem [resolvable:$true] %s493
      %496 = dma.vmem_to_hbm [thread:$0]  %s494, 16, %s7, [#allocation4]
    $region33: #{tpu_custom_call.1} parent=1 // pred_fallthru
      _
    // Predicated region
    $region34: #{tpu_custom_call.1} parent=1 // pred_check
      _
    $region35: #{tpu_custom_call.1} parent=1 // pred_check_branch
      %498 = sbr.rel (0) target = $region37
    $region36: #{tpu_custom_call.1} parent=1 // pred_region
      %499 = dma.done [#allocation4], 16
    $region37: #{tpu_custom_call.1} parent=1 // pred_fallthru
      _
    %500 = vsyncpa [#allocation4], 1

</llo_original>
